<compile_context>
chip_gen: v7x
topology: tpu7x:2x2x1
jax: 0.10.0
libtpu: 0.0.40
codegen_flags: <defaults>
</compile_context>

<pallas_src>
import jax
import jax.numpy as jnp
import numpy as np
from jax.experimental import pallas as pl
from jax.experimental.pallas import tpu as pltpu

INPUT_DIM = 32      # synthetic choice (undefined global in the original file)
FF_HIDDEN_DIM = 32  # args.ff_hidden_dim


def _round_up(n, m):
    return ((n + m - 1) // m) * m


def _default_block_rows():
    """Generation-aware batch tile (rows per grid step).

    Per-step input bytes (2 inputs x 128 B/row lane-padded in VMEM, but 128 B/row
    from HBM) should exceed ~0.35 us x HBM bandwidth:
      v5e (~0.8 TB/s)  -> 2048 rows
      v6e (~1.4 TB/s)  -> 4096 rows
      v7x (~3.2 TB/s)  -> 8192 rows (still well under 64 MiB VMEM incl. lane padding)
    """
    try:
        kind = jax.devices()[0].device_kind.lower()
    except Exception:
        return 2048
    if "v7" in kind or "7x" in kind:
        return 8192
    if "v6" in kind:
        return 4096
    return 2048  # v5e / anything unrecognized


def _siamese_kernel(x1_ref, x2_ref, w1_ref, b1_ref, w2_ref, b2_ref, o_ref):
    w1 = w1_ref[...]              # (D, H)  VMEM-resident across grid steps
    b1 = b1_ref[...]              # (1, H)
    w2 = w2_ref[...]              # (1, H)
    b2 = b2_ref[0]                # scalar layer-2 bias from SMEM

    def pre_activation(x):
        # Layer 1 on the MXU, ReLU on the VPU.
        h = jnp.dot(x, w1, preferred_element_type=jnp.float32) + b1
        h = jnp.maximum(h, 0.0)
        # Layer 2 (H -> 1) off the MXU: VPU multiply by the (1, H) weight row
        # + XLU lane reduction (an N=1 matmul would waste the systolic array).
        return jnp.sum(h * w2, axis=-1, keepdims=True)            # (tb, 1)

    # Two independent matmuls against the shared weights (no input concatenate copy).
    y = jnp.concatenate(
        [pre_activation(x1_ref[...]), pre_activation(x2_ref[...])], axis=1)  # (tb, 2)

    # Relayout to lane-dense (2, tb) via one XLU transpose *before* the epilogue so
    # bias/ReLU/sigmoid and the output store operate on dense vregs.
    z = jnp.transpose(y) + b2                                     # (2, tb)
    z = jnp.maximum(z, 0.0)
    o_ref[...] = (1.0 / (1.0 + jnp.exp(-z))).astype(o_ref.dtype)


def feed_forward_siamese(x1, x2, w1, b1, w2, b2, *, block_rows=None):
    """x1, x2: (B, INPUT_DIM) float32 -> ((B, 1), (B, 1)) float32."""
    B, D = x1.shape
    H = w1.shape[1]
    if block_rows is None:
        block_rows = _default_block_rows()

    # Batch tile:
    #  - small batches: one full-array block (always layout-legal, any B);
    #  - large batches: a multiple of 128 (lane-dense (2, tb) output block needs
    #    tb % 128 == 0), capped at ceil(B/2) so the "parallel" axis always has
    #    >= 2 grid steps for v7x's two TensorCores.
    if B <= min(block_rows, 1024):
        tb = B
    else:
        tb = min(block_rows, _round_up(pl.cdiv(B, 2), 128))
        tb = max(128, (tb // 128) * 128)

    grid = (pl.cdiv(B, tb),)   # ragged tail handled by Pallas (no jnp.pad HBM copies)

    # Scoped-VMEM budget: (tb, 32) f32 blocks are lane-padded to (tb, 128) in VMEM.
    padded_row_bytes = 128 * 4
    vmem_est = (2 * 2 * tb * padded_row_bytes      # x1/x2 tiles, double-buffered
                + 2 * tb * padded_row_bytes        # hidden slabs / temporaries
                + 2 * 2 * tb * 4                   # (2, tb) output, double-buffered
                + (2 << 20))                       # weights + slack
    vmem_limit = int(min(max(32 << 20, 2 * vmem_est), 56 << 20))

    out = pl.pallas_call(
        _siamese_kernel,
        out_shape=jax.ShapeDtypeStruct((2, B), jnp.float32),
        grid=grid,
        in_specs=[
            pl.BlockSpec((tb, D), lambda i: (i, 0)),    # x1 batch tile
            pl.BlockSpec((tb, D), lambda i: (i, 0)),    # x2 batch tile
            pl.BlockSpec((D, H), lambda i: (0, 0)),     # w1: VMEM-resident
            pl.BlockSpec((1, H), lambda i: (0, 0)),     # b1 row: VMEM-resident
            pl.BlockSpec((1, H), lambda i: (0, 0)),     # w2 row: VMEM-resident
            pl.BlockSpec(memory_space=pltpu.MemorySpace.SMEM),  # b2 scalar via SMEM
        ],
        out_specs=pl.BlockSpec((2, tb), lambda i: (0, i)),       # lane-dense output
        compiler_params=pltpu.CompilerParams(
            dimension_semantics=("parallel",),   # megacore-shard the batch on v7x
            vmem_limit_bytes=vmem_limit,
        ),
    )(x1, x2, w1, b1.reshape(1, H), w2.reshape(1, H), b2)

    return out[0].reshape(B, 1), out[1].reshape(B, 1)


def init_params(key):
    """Deterministic init mirroring weights_init_normal:
       weight ~ N(0, 1/sqrt(in_features)), bias = 0."""
    k1, k2 = jax.random.split(key)
    w1 = jax.random.normal(k1, (INPUT_DIM, FF_HIDDEN_DIM), jnp.float32) / np.sqrt(INPUT_DIM)
    b1 = jnp.zeros((FF_HIDDEN_DIM,), jnp.float32)
    w2 = jax.random.normal(k2, (FF_HIDDEN_DIM, 1), jnp.float32) / np.sqrt(FF_HIDDEN_DIM)
    b2 = jnp.zeros((1,), jnp.float32)
    return w1, b1, w2, b2


def _ref_forward(x, w1, b1, w2, b2):
    h = jnp.maximum(x @ w1 + b1, 0.0)
    y = jnp.maximum(h @ w2 + b2, 0.0)
    return 1.0 / (1.0 + jnp.exp(-y))


if __name__ == "__main__":
    key = jax.random.PRNGKey(0)
    kx1, kx2, kp = jax.random.split(key, 3)

    # --- small single-tile demo, faithful init (zero biases) ---
    B = 8
    x1 = jax.random.normal(kx1, (B, INPUT_DIM), jnp.float32)
    x2 = jax.random.normal(kx2, (B, INPUT_DIM), jnp.float32)
    w1, b1, w2, b2 = init_params(kp)

    y1, y2 = feed_forward_siamese(x1, x2, w1, b1, w2, b2)
    jax.block_until_ready((y1, y2))
    np.testing.assert_allclose(np.asarray(y1), np.asarray(_ref_forward(x1, w1, b1, w2, b2)),
                               rtol=1e-5, atol=1e-5)
    np.testing.assert_allclose(np.asarray(y2), np.asarray(_ref_forward(x2, w1, b1, w2, b2)),
                               rtol=1e-5, atol=1e-5)

    # --- exercise the multi-tile grid + ragged tail path (128-row tiles, B=300,
    #     non-zero biases) ---
    B2 = 300
    kb1, kb2, kx3, kx4 = jax.random.split(jax.random.PRNGKey(1), 4)
    x1b = jax.random.normal(kx3, (B2, INPUT_DIM), jnp.float32)
    x2b = jax.random.normal(kx4, (B2, INPUT_DIM), jnp.float32)
    b1r = 0.1 * jax.random.normal(kb1, (FF_HIDDEN_DIM,), jnp.float32)
    b2r = jnp.array([0.3], jnp.float32)

    y1b, y2b = feed_forward_siamese(x1b, x2b, w1, b1r, w2, b2r, block_rows=128)
    jax.block_until_ready((y1b, y2b))
    np.testing.assert_allclose(np.asarray(y1b), np.asarray(_ref_forward(x1b, w1, b1r, w2, b2r)),
                               rtol=1e-5, atol=1e-5)
    np.testing.assert_allclose(np.asarray(y2b), np.asarray(_ref_forward(x2b, w1, b1r, w2, b2r)),
                               rtol=1e-5, atol=1e-5)

    print("KERNEL_OK")
</pallas_src>

<mosaic_0001>
module attributes {stable_mosaic.version = 11 : i64} {
  func.func @_siamese_kernel(%arg0: i32, %arg1: memref<8x32xf32, #tpu.memory_space<vmem>>, %arg2: memref<8x32xf32, #tpu.memory_space<vmem>>, %arg3: memref<32x32xf32, #tpu.memory_space<vmem>>, %arg4: memref<1x32xf32, #tpu.memory_space<vmem>>, %arg5: memref<1x32xf32, #tpu.memory_space<vmem>>, %arg6: memref<1xf32, #tpu.memory_space<smem>>, %arg7: memref<2x8xf32, #tpu.memory_space<vmem>>) attributes {dimension_semantics = [#tpu.dimension_semantics<parallel>], iteration_bounds = array<i64: 1>, scalar_prefetch = 0 : i64, scratch_operands = 0 : i64, tpu.core_type = #tpu.core_type<tc>, window_params = [{transform_indices = @transform_0, window_bounds = array<i64: 8, 32>}, {transform_indices = @transform_1, window_bounds = array<i64: 8, 32>}, {pipeline_mode = #tpu.pipeline_mode<synchronous>, transform_indices = @transform_2, window_bounds = array<i64: 32, 32>}, {pipeline_mode = #tpu.pipeline_mode<synchronous>, transform_indices = @transform_3, window_bounds = array<i64: 1, 32>}, {pipeline_mode = #tpu.pipeline_mode<synchronous>, transform_indices = @transform_4, window_bounds = array<i64: 1, 32>}, {transform_indices = @transform_5, window_bounds = array<i64: 1>}, {transform_indices = @transform_6, window_bounds = array<i64: 2, 8>}]} {
    %c0 = arith.constant 0 : index
    %c0_0 = arith.constant 0 : index
    %0 = vector.load %arg3[%c0, %c0_0] : memref<32x32xf32, #tpu.memory_space<vmem>>, vector<32x32xf32>
    %c0_1 = arith.constant 0 : index
    %c0_2 = arith.constant 0 : index
    %1 = vector.load %arg4[%c0_1, %c0_2] : memref<1x32xf32, #tpu.memory_space<vmem>>, vector<1x32xf32>
    %c0_3 = arith.constant 0 : index
    %c0_4 = arith.constant 0 : index
    %2 = vector.load %arg5[%c0_3, %c0_4] : memref<1x32xf32, #tpu.memory_space<vmem>>, vector<1x32xf32>
    %c0_5 = arith.constant 0 : index
    %3 = memref.load %arg6[%c0_5] : memref<1xf32, #tpu.memory_space<smem>>
    %c0_6 = arith.constant 0 : index
    %c0_7 = arith.constant 0 : index
    %4 = vector.load %arg1[%c0_6, %c0_7] : memref<8x32xf32, #tpu.memory_space<vmem>>, vector<8x32xf32>
    %cst = arith.constant dense<0.000000e+00> : vector<8x32xf32>
    %5 = tpu.matmul %4, %0, %cst {dimension_numbers = #tpu.dot_dimension_numbers<[1], [0], [0], [1], [0, 0, 1, 1], [], []>} : vector<8x32xf32>, vector<32x32xf32>, vector<8x32xf32> -> vector<8x32xf32>
    %6 = vector.broadcast %1 : vector<1x32xf32> to vector<8x32xf32>
    %7 = arith.addf %5, %6 : vector<8x32xf32>
    %cst_8 = arith.constant 0.000000e+00 : f32
    %8 = vector.broadcast %cst_8 : f32 to vector<8x32xf32>
    %9 = arith.maximumf %7, %8 : vector<8x32xf32>
    %10 = vector.broadcast %2 : vector<1x32xf32> to vector<8x32xf32>
    %11 = arith.mulf %9, %10 : vector<8x32xf32>
    %cst_9 = arith.constant dense<0.000000e+00> : vector<8xf32>
    %12 = vector.multi_reduction <add>, %11, %cst_9 [1] : vector<8x32xf32> to vector<8xf32>
    %13 = vector.shape_cast %12 : vector<8xf32> to vector<8x1xf32>
    %c0_10 = arith.constant 0 : index
    %c0_11 = arith.constant 0 : index
    %14 = vector.load %arg2[%c0_10, %c0_11] : memref<8x32xf32, #tpu.memory_space<vmem>>, vector<8x32xf32>
    %cst_12 = arith.constant dense<0.000000e+00> : vector<8x32xf32>
    %15 = tpu.matmul %14, %0, %cst_12 {dimension_numbers = #tpu.dot_dimension_numbers<[1], [0], [0], [1], [0, 0, 1, 1], [], []>} : vector<8x32xf32>, vector<32x32xf32>, vector<8x32xf32> -> vector<8x32xf32>
    %16 = vector.broadcast %1 : vector<1x32xf32> to vector<8x32xf32>
    %17 = arith.addf %15, %16 : vector<8x32xf32>
    %cst_13 = arith.constant 0.000000e+00 : f32
    %18 = vector.broadcast %cst_13 : f32 to vector<8x32xf32>
    %19 = arith.maximumf %17, %18 : vector<8x32xf32>
    %20 = vector.broadcast %2 : vector<1x32xf32> to vector<8x32xf32>
    %21 = arith.mulf %19, %20 : vector<8x32xf32>
    %cst_14 = arith.constant dense<0.000000e+00> : vector<8xf32>
    %22 = vector.multi_reduction <add>, %21, %cst_14 [1] : vector<8x32xf32> to vector<8xf32>
    %23 = vector.shape_cast %22 : vector<8xf32> to vector<8x1xf32>
    %24 = tpu.concatenate %13, %23 in 1 : vector<8x1xf32>, vector<8x1xf32> -> vector<8x2xf32>
    %25 = tpu.transpose %24, [1, 0] : vector<8x2xf32> -> vector<2x8xf32>
    %26 = vector.broadcast %3 : f32 to vector<2x8xf32>
    %27 = arith.addf %25, %26 : vector<2x8xf32>
    %cst_15 = arith.constant 0.000000e+00 : f32
    %28 = vector.broadcast %cst_15 : f32 to vector<2x8xf32>
    %29 = arith.maximumf %27, %28 : vector<2x8xf32>
    %cst_16 = arith.constant 0.000000e+00 : f32
    %30 = vector.broadcast %cst_16 : f32 to vector<2x8xf32>
    %31 = arith.subf %30, %29 : vector<2x8xf32>
    %32 = math.exp %31 : vector<2x8xf32>
    %cst_17 = arith.constant 1.000000e+00 : f32
    %33 = vector.broadcast %cst_17 : f32 to vector<2x8xf32>
    %34 = arith.addf %33, %32 : vector<2x8xf32>
    %cst_18 = arith.constant 1.000000e+00 : f32
    %35 = vector.broadcast %cst_18 : f32 to vector<2x8xf32>
    %36 = arith.divf %35, %34 : vector<2x8xf32>
    %c0_19 = arith.constant 0 : index
    %c0_20 = arith.constant 0 : index
    %37 = vector.load %arg7[%c0_19, %c0_20] : memref<2x8xf32, #tpu.memory_space<vmem>>, vector<2x8xf32>
    tpu.vector_store %arg7[%c0_19, %c0_20], %36 {strides = array<i32>} : memref<2x8xf32, #tpu.memory_space<vmem>>, vector<2x8xf32>,
    return
  }
  func.func @transform_0(%arg0: i32) -> (i32, i32) {
    %c0_i32 = arith.constant 0 : i32
    %c0_i32_0 = arith.constant 0 : i32
    return %arg0, %c0_i32 : i32, i32
  }
  func.func @transform_1(%arg0: i32) -> (i32, i32) {
    %c0_i32 = arith.constant 0 : i32
    %c0_i32_0 = arith.constant 0 : i32
    return %arg0, %c0_i32 : i32, i32
  }
  func.func @transform_2(%arg0: i32) -> (i32, i32) {
    %c0_i32 = arith.constant 0 : i32
    %c0_i32_0 = arith.constant 0 : i32
    %c0_i32_1 = arith.constant 0 : i32
    return %c0_i32, %c0_i32_0 : i32, i32
  }
  func.func @transform_3(%arg0: i32) -> (i32, i32) {
    %c0_i32 = arith.constant 0 : i32
    %c0_i32_0 = arith.constant 0 : i32
    %c0_i32_1 = arith.constant 0 : i32
    return %c0_i32, %c0_i32_0 : i32, i32
  }
  func.func @transform_4(%arg0: i32) -> (i32, i32) {
    %c0_i32 = arith.constant 0 : i32
    %c0_i32_0 = arith.constant 0 : i32
    %c0_i32_1 = arith.constant 0 : i32
    return %c0_i32, %c0_i32_0 : i32, i32
  }
  func.func @transform_5(%arg0: i32) -> i32 {
    %c0_i32 = arith.constant 0 : i32
    %c0_i32_0 = arith.constant 0 : i32
    return %c0_i32 : i32
  }
  func.func @transform_6(%arg0: i32) -> (i32, i32) {
    %c0_i32 = arith.constant 0 : i32
    %c0_i32_0 = arith.constant 0 : i32
    return %c0_i32, %arg0 : i32, i32
  }
}

</mosaic_0001>

<llo_original>
// kernel: tpu_custom_call.1
$region0: #{tpu_custom_call.1}
  #allocation0 [shape = 'u32[]', space=smem, size = 0x4, offset = 0x4, fixed_abs, tag = 'smem constant byte address 0x4 - core index']
  #allocation1 [shape = 'u32[144,128]{1,0:T(1,128)}', space=vmem, size = 0x12000, scoped, tag = 'internal scratch']
  #allocation2 [shape = 'f32[1]{0:T(128)S(6)}', space=smem, size = 0x200, scoped, tag = 'scoped memory for tpu_custom_call.1']
  %s0 = inlined_call_operand.hbm [shape: f32[8,32], index: 0, kind: input, shape index: {}]
  %s1 = inlined_call_operand.hbm [shape: f32[8,32], index: 1, kind: input, shape index: {}]
  %s2 = inlined_call_operand.hbm [shape: f32[32,32], index: 2, kind: input, shape index: {}]
  %s3 = inlined_call_operand.vmem [shape: f32[1,32], index: 3, kind: input, shape index: {}]
  %s4 = inlined_call_operand.vmem [shape: f32[1,32], index: 4, kind: input, shape index: {}]
  %s5 = inlined_call_operand.<no memory space> [shape: f32[1], index: 5, kind: input, shape index: {}]
  %s6 = inlined_call_operand.hbm [shape: f32[2,8], index: 6, kind: output, shape index: {}]
  %s7 = sld [smem:[#allocation0]]
  $region46: #{tpu_custom_call.1} parent=0
    _
  %s9 = ssub.s32 1, %s7
  %s10 = scalar_select 0, %s9, %s7
  %11 = sst [smem:[#allocation2]] %s5
  $region1: #{tpu_custom_call.1} parent=0
    #allocation3 [shape = 'u8[4096]{0}', space=vmem, size = 0x1000, scoped, tag = 'input window, operand 0, single buffered']
    #allocation4 [shape = 's32[1]{0}', space=sflag, size = 0x4, scoped, tag = 'scoped memory for tpu_custom_call.1']
    #allocation5 [shape = 's32[1]{0}', space=sflag, size = 0x4, scoped, tag = 'scoped memory for tpu_custom_call.1']
    #allocation6 [shape = 'u8[4096]{0}', space=vmem, size = 0x1000, scoped, tag = 'input window, operand 1, single buffered']
    #allocation7 [shape = 's32[1]{0}', space=sflag, size = 0x4, scoped, tag = 'scoped memory for tpu_custom_call.1']
    #allocation8 [shape = 'u8[16384]{0}', space=vmem, size = 0x4000, scoped, tag = 'input window, operand 2, single buffered']
    #allocation9 [shape = 'u8[1024]{0}', space=vmem, size = 0x400, scoped, tag = 'output window, operand 0, single buffered']
    %12 = vsyncpa [#allocation4], 0
    %13 = vsyncpa [#allocation7], 0
    %14 = vsyncpa [#allocation5], 0
    // Predicated region
    $region2: #{tpu_custom_call.1} parent=1 // pred_check
      _
    $region3: #{tpu_custom_call.1} parent=1 // pred_check_branch
      %16 = sbr.rel (0) target = $region5
    $region4: #{tpu_custom_call.1} parent=1 // pred_region
      %s18 = ssub.s32 128, 128
      %19 = vsyncadd [#allocation4], %s18
      %s21 = sshll.u32 [#allocation3], 4
      %s22 = int_to_ptr.vmem [resolvable:$true] %s21
      %24 = dma.hbm_to_vmem [thread:$0]  %s0, 128, %s22, [#allocation4]
    $region5: #{tpu_custom_call.1} parent=1 // pred_fallthru
      _
    // Predicated region
    $region6: #{tpu_custom_call.1} parent=1 // pred_check
      _
    $region7: #{tpu_custom_call.1} parent=1 // pred_check_branch
      %26 = sbr.rel (0) target = $region9
    $region8: #{tpu_custom_call.1} parent=1 // pred_region
      %s28 = ssub.s32 128, 128
      %29 = vsyncadd [#allocation7], %s28
      %s31 = sshll.u32 [#allocation6], 4
      %s32 = int_to_ptr.vmem [resolvable:$true] %s31
      %34 = dma.hbm_to_vmem [thread:$0]  %s1, 128, %s32, [#allocation7]
    $region9: #{tpu_custom_call.1} parent=1 // pred_fallthru
      _
    // Predicated region
    $region10: #{tpu_custom_call.1} parent=1 // pred_check
      _
    $region11: #{tpu_custom_call.1} parent=1 // pred_check_branch
      %36 = sbr.rel (0) target = $region13
    $region12: #{tpu_custom_call.1} parent=1 // pred_region
      %s38 = ssub.s32 512, 512
      %39 = vsyncadd [#allocation7], %s38
      %s40 = sshll.u32 [#allocation8], 4
      %s41 = int_to_ptr.vmem [resolvable:$true] %s40
      %46 = dma.hbm_to_vmem [thread:$0]  %s2, 512, %s41, [#allocation7], 128, 128, 8
    $region13: #{tpu_custom_call.1} parent=1 // pred_fallthru
      _
    // Predicated region
    $region14: #{tpu_custom_call.1} parent=1 // pred_check
      _
    $region15: #{tpu_custom_call.1} parent=1 // pred_check_branch
      %48 = sbr.rel (0) target = $region17
    $region16: #{tpu_custom_call.1} parent=1 // pred_region
      _
    $region17: #{tpu_custom_call.1} parent=1 // pred_fallthru
      _
    // Predicated region
    $region18: #{tpu_custom_call.1} parent=1 // pred_check
      _
    $region19: #{tpu_custom_call.1} parent=1 // pred_check_branch
      %50 = sbr.rel (0) target = $region21
    $region20: #{tpu_custom_call.1} parent=1 // pred_region
      _
    $region21: #{tpu_custom_call.1} parent=1 // pred_fallthru
      _
    // Predicated region
    $region22: #{tpu_custom_call.1} parent=1 // pred_check
      _
    $region23: #{tpu_custom_call.1} parent=1 // pred_check_branch
      %52 = sbr.rel (0) target = $region25
    $region24: #{tpu_custom_call.1} parent=1 // pred_region
      _
    $region25: #{tpu_custom_call.1} parent=1 // pred_fallthru
      _
    // Predicated region
    $region26: #{tpu_custom_call.1} parent=1 // pred_check
      _
    $region27: #{tpu_custom_call.1} parent=1 // pred_check_branch
      %54 = sbr.rel (0) target = $region29
    $region28: #{tpu_custom_call.1} parent=1 // pred_region
      %55 = dma.done [#allocation4], 128
    $region29: #{tpu_custom_call.1} parent=1 // pred_fallthru
      _
    // Predicated region
    $region30: #{tpu_custom_call.1} parent=1 // pred_check
      _
    $region31: #{tpu_custom_call.1} parent=1 // pred_check_branch
      %57 = sbr.rel (0) target = $region33
    $region32: #{tpu_custom_call.1} parent=1 // pred_region
      %58 = dma.done [#allocation7], 128
    $region33: #{tpu_custom_call.1} parent=1 // pred_fallthru
      _
    // Predicated region
    $region34: #{tpu_custom_call.1} parent=1 // pred_check
      _
    $region35: #{tpu_custom_call.1} parent=1 // pred_check_branch
      %60 = sbr.rel (0) target = $region37
    $region36: #{tpu_custom_call.1} parent=1 // pred_region
      %61 = dma.done [#allocation7], 512
    $region37: #{tpu_custom_call.1} parent=1 // pred_fallthru
      _
    %v62 = vld [vmem:[#allocation8] sm:$0xff]
    %v63 = vld [vmem:[#allocation8 + $0x8] sm:$0xff]
    %v64 = vld [vmem:[#allocation8 + $0x10] sm:$0xff]
    %v65 = vld [vmem:[#allocation8 + $0x18] sm:$0xff]
    %v66 = vld [vmem:[%s3] sm:$0x1]
    %v67 = vld [vmem:[%s4] sm:$0x1]
    %s68 = sld [smem:[#allocation2]]
    %v69 = vld [vmem:[#allocation3] sm:$0xff]
    %v71 = vlaneseq
    %v72 = vshrl.u32 %v71, 7
    %v73 = vsub.s32 0, %v72
    %v74 = vrot.slane %v66, %v73
    %vm76 = vcmask 261120
    %v78 = vsel %vm76, %v69, 0
    %80 = vmatprep.subr.mxu0 0.0
    %81 = vmatpush1.msra.mxu0 %v62
    %82 = vmatprep.subr.mxu0 0.0
    %83 = vmatpush1.msra.mxu0 %v63
    %84 = vmatprep.subr.mxu0 0.0
    %85 = vmatpush1.msra.mxu0 %v64
    %86 = vmatprep.subr.mxu0 0.0
    %87 = vmatpush1.msra.mxu0 %v65
    %88 = vmatprep.subr.mxu0 0.0
    %89 = vmatpush1.msra.mxu0 0.0
    %90 = vmatprep.subr.mxu0 0.0
    %91 = vmatpush1.msra.mxu0 0.0
    %92 = vmatprep.subr.mxu0 0.0
    %93 = vmatpush1.msra.mxu0 0.0
    %94 = vmatprep.subr.mxu0 0.0
    %95 = vmatpush1.msra.mxu0 0.0
    %96 = vmatprep.subr.mxu0 0.0
    %97 = vmatpush1.msra.mxu0 0.0
    %98 = vmatprep.subr.mxu0 0.0
    %99 = vmatpush1.msra.mxu0 0.0
    %100 = vmatprep.subr.mxu0 0.0
    %101 = vmatpush1.msra.mxu0 0.0
    %102 = vmatprep.subr.mxu0 0.0
    %103 = vmatpush1.msra.mxu0 0.0
    %104 = vmatprep.subr.mxu0 0.0
    %105 = vmatpush1.msra.mxu0 0.0
    %106 = vmatprep.subr.mxu0 0.0
    %107 = vmatpush1.msra.mxu0 0.0
    %108 = vmatprep.subr.mxu0 0.0
    %109 = vmatpush1.msra.mxu0 0.0
    %110 = vmatprep.subr.mxu0 0.0
    %111 = vmatpush1.msra.mxu0 0.0
    %112 = vmatprep.subr.mxu0 0.0
    %113 = vmatpush1.msra.mxu0 0.0
    %114 = vmatprep.subr.mxu0 0.0
    %115 = vmatpush1.msra.mxu0 0.0
    %116 = vmatprep.subr.mxu0 0.0
    %117 = vmatpush1.msra.mxu0 0.0
    %118 = vmatprep.subr.mxu0 0.0
    %119 = vmatpush1.msra.mxu0 0.0
    %120 = vmatprep.subr.mxu0 0.0
    %121 = vmatpush1.msra.mxu0 0.0
    %122 = vmatprep.subr.mxu0 0.0
    %123 = vmatpush1.msra.mxu0 0.0
    %124 = vmatprep.subr.mxu0 0.0
    %125 = vmatpush1.msra.mxu0 0.0
    %126 = vmatprep.subr.mxu0 0.0
    %127 = vmatpush1.msra.mxu0 0.0
    %128 = vmatprep.subr.mxu0 0.0
    %129 = vmatpush1.msra.mxu0 0.0
    %130 = vmatprep.subr.mxu0 0.0
    %131 = vmatpush1.msra.mxu0 0.0
    %132 = vmatprep.subr.mxu0 0.0
    %133 = vmatpush1.msra.mxu0 0.0
    %134 = vmatprep.subr.mxu0 0.0
    %135 = vmatpush1.msra.mxu0 0.0
    %136 = vmatprep.subr.mxu0 0.0
    %137 = vmatpush1.msra.mxu0 0.0
    %138 = vmatprep.subr.mxu0 0.0
    %139 = vmatpush1.msra.mxu0 0.0
    %140 = vmatprep.subr.mxu0 0.0
    %141 = vmatpush1.msra.mxu0 0.0
    %142 = vmatprep.subr.mxu0 0.0
    %143 = vmatpush1.msra.mxu0 0.0
    %144 = vmatprep.mubr.f32.mxu0 0.0
    %145 = vmatmul.mubr.f32.gmra.mrb[0].mxu0 %v78
    %v146 = vpop.f32.mrb[0].mxu0
    %v147 = vadd.f32 %v74, %v146
    %v148 = vpop.f32.mrb[0].mxu0
    %149 = vdwg.mxu0
    %v150 = vmax.f32 %v147, 0.0
    %v152 = vlaneseq
    %v153 = vshrl.u32 %v152, 7
    %v154 = vsub.s32 0, %v153
    %v155 = vrot.slane %v67, %v154
    %v157 = vmul.f32 %v150, %v155
    %v158 = vsel %vm76, %v157, 0.0
    %159 = vadd.xlane.f32.xlu0 %v158
    %v160 = vpop.xlane.xlu0 %159
    %v161 = vld [vmem:[#allocation6] sm:$0xff]
    %v163 = vsel %vm76, %v161, 0
    %165 = vmatprep.subr.mxu0 0.0
    %166 = vmatpush1.msra.mxu0 %v62
    %167 = vmatprep.subr.mxu0 0.0
    %168 = vmatpush1.msra.mxu0 %v63
    %169 = vmatprep.subr.mxu0 0.0
    %170 = vmatpush1.msra.mxu0 %v64
    %171 = vmatprep.subr.mxu0 0.0
    %172 = vmatpush1.msra.mxu0 %v65
    %173 = vmatprep.subr.mxu0 0.0
    %174 = vmatpush1.msra.mxu0 0.0
    %175 = vmatprep.subr.mxu0 0.0
    %176 = vmatpush1.msra.mxu0 0.0
    %177 = vmatprep.subr.mxu0 0.0
    %178 = vmatpush1.msra.mxu0 0.0
    %179 = vmatprep.subr.mxu0 0.0
    %180 = vmatpush1.msra.mxu0 0.0
    %181 = vmatprep.subr.mxu0 0.0
    %182 = vmatpush1.msra.mxu0 0.0
    %183 = vmatprep.subr.mxu0 0.0
    %184 = vmatpush1.msra.mxu0 0.0
    %185 = vmatprep.subr.mxu0 0.0
    %186 = vmatpush1.msra.mxu0 0.0
    %187 = vmatprep.subr.mxu0 0.0
    %188 = vmatpush1.msra.mxu0 0.0
    %189 = vmatprep.subr.mxu0 0.0
    %190 = vmatpush1.msra.mxu0 0.0
    %191 = vmatprep.subr.mxu0 0.0
    %192 = vmatpush1.msra.mxu0 0.0
    %193 = vmatprep.subr.mxu0 0.0
    %194 = vmatpush1.msra.mxu0 0.0
    %195 = vmatprep.subr.mxu0 0.0
    %196 = vmatpush1.msra.mxu0 0.0
    %197 = vmatprep.subr.mxu0 0.0
    %198 = vmatpush1.msra.mxu0 0.0
    %199 = vmatprep.subr.mxu0 0.0
    %200 = vmatpush1.msra.mxu0 0.0
    %201 = vmatprep.subr.mxu0 0.0
    %202 = vmatpush1.msra.mxu0 0.0
    %203 = vmatprep.subr.mxu0 0.0
    %204 = vmatpush1.msra.mxu0 0.0
    %205 = vmatprep.subr.mxu0 0.0
    %206 = vmatpush1.msra.mxu0 0.0
    %207 = vmatprep.subr.mxu0 0.0
    %208 = vmatpush1.msra.mxu0 0.0
    %209 = vmatprep.subr.mxu0 0.0
    %210 = vmatpush1.msra.mxu0 0.0
    %211 = vmatprep.subr.mxu0 0.0
    %212 = vmatpush1.msra.mxu0 0.0
    %213 = vmatprep.subr.mxu0 0.0
    %214 = vmatpush1.msra.mxu0 0.0
    %215 = vmatprep.subr.mxu0 0.0
    %216 = vmatpush1.msra.mxu0 0.0
    %217 = vmatprep.subr.mxu0 0.0
    %218 = vmatpush1.msra.mxu0 0.0
    %219 = vmatprep.subr.mxu0 0.0
    %220 = vmatpush1.msra.mxu0 0.0
    %221 = vmatprep.subr.mxu0 0.0
    %222 = vmatpush1.msra.mxu0 0.0
    %223 = vmatprep.subr.mxu0 0.0
    %224 = vmatpush1.msra.mxu0 0.0
    %225 = vmatprep.subr.mxu0 0.0
    %226 = vmatpush1.msra.mxu0 0.0
    %227 = vmatprep.subr.mxu0 0.0
    %228 = vmatpush1.msra.mxu0 0.0
    %229 = vmatprep.mubr.f32.mxu0 0.0
    %230 = vmatmul.mubr.f32.gmra.mrb[0].mxu0 %v163
    %v231 = vpop.f32.mrb[0].mxu0
    %v232 = vadd.f32 %v74, %v231
    %v233 = vpop.f32.mrb[0].mxu0
    %234 = vdwg.mxu0
    %v235 = vmax.f32 %v232, 0.0
    %v236 = vmul.f32 %v235, %v155
    %v237 = vsel %vm76, %v236, 0.0
    %238 = vadd.xlane.f32.xlu0 %v237
    %v239 = vpop.xlane.xlu0 %238
    %vm240 = vcmask 7168
    %v241 = vsel %vm240, %v160, %v239
    %242 = vxpose.xlu0.b32.start [1/16] %v241, 128
    %243 = vxpose.xlu0.b32.cont [2/16] 0.0, 128
    %244 = vxpose.xlu0.b32.cont [3/16] 0.0, 128
    %245 = vxpose.xlu0.b32.cont [4/16] 0.0, 128
    %246 = vxpose.xlu0.b32.cont [5/16] 0.0, 128
    %247 = vxpose.xlu0.b32.cont [6/16] 0.0, 128
    %248 = vxpose.xlu0.b32.cont [7/16] 0.0, 128
    %249 = vxpose.xlu0.b32.cont [8/16] 0.0, 128
    %250 = vxpose.xlu0.b32.cont [9/16] 0.0, 128
    %251 = vxpose.xlu0.b32.cont [10/16] 0.0, 128
    %252 = vxpose.xlu0.b32.cont [11/16] 0.0, 128
    %253 = vxpose.xlu0.b32.cont [12/16] 0.0, 128
    %254 = vxpose.xlu0.b32.cont [13/16] 0.0, 128
    %255 = vxpose.xlu0.b32.cont [14/16] 0.0, 128
    %256 = vxpose.xlu0.b32.cont [15/16] 0.0, 128
    %257 = vxpose.xlu0.b32.end [16/16] 0.0, 128
    %v258 = vpop.trf.xlu0
    %v259 = vpop.trf.xlu0
    %v260 = vpop.trf.xlu0
    %v261 = vpop.trf.xlu0
    %v262 = vpop.trf.xlu0
    %v263 = vpop.trf.xlu0
    %v264 = vpop.trf.xlu0
    %v265 = vpop.trf.xlu0
    %v266 = vpop.trf.xlu0
    %v267 = vpop.trf.xlu0
    %v268 = vpop.trf.xlu0
    %v269 = vpop.trf.xlu0
    %v270 = vpop.trf.xlu0
    %v271 = vpop.trf.xlu0
    %v272 = vpop.trf.xlu0
    %v273 = vpop.trf.xlu0
    %v274 = vstv %s68
    %v275 = vadd.f32 %v258, %v274
    %v276 = vmax.f32 %v275, 0.0
    %v277 = vsub.f32 0.0, %v276
    %v278 = vmul.f32 %v277, 1.442695
    %v279 = vpow.pop %v278
    %v280 = vadd.f32 %v279, 1.0
    %v281 = vrcp.pop %v280
    %v282 = vmul.f32 1.0, %v281
    %vm283 = vcmask 58368
    %284 = vst.msk [vmem:[#allocation9] sm:$0x3] %vm283, %v282
    // Predicated region
    $region38: #{tpu_custom_call.1} parent=1 // pred_check
      _
    $region39: #{tpu_custom_call.1} parent=1 // pred_check_branch
      %286 = sbr.rel (0) target = $region41
    $region40: #{tpu_custom_call.1} parent=1 // pred_region
      %s288 = ssub.s32 32, 32
      %289 = vsyncadd [#allocation5], %s288
      %s291 = sshll.u32 [#allocation9], 4
      %s292 = int_to_ptr.vmem [resolvable:$true] %s291
      %294 = dma.vmem_to_hbm [thread:$0]  %s292, 32, %s6, [#allocation5]
    $region41: #{tpu_custom_call.1} parent=1 // pred_fallthru
      _
    // Predicated region
    $region42: #{tpu_custom_call.1} parent=1 // pred_check
      _
    $region43: #{tpu_custom_call.1} parent=1 // pred_check_branch
      %296 = sbr.rel (0) target = $region45
    $region44: #{tpu_custom_call.1} parent=1 // pred_region
      %297 = dma.done [#allocation5], 32
    $region45: #{tpu_custom_call.1} parent=1 // pred_fallthru
      _
    %298 = vsyncpa [#allocation4], 1
    %299 = vsyncpa [#allocation7], 1
    %300 = vsyncpa [#allocation5], 1

</llo_original>
